<compile_context>
chip_gen: v7x
topology: tpu7x:2x2x1
jax: 0.10.0
libtpu: 0.0.40
codegen_flags: <defaults>
</compile_context>

<pallas_src>
import jax
import jax.numpy as jnp
from jax.experimental import pallas as pl
from jax.experimental.pallas import tpu as pltpu


def _round_up(x, m):
    return (x + m - 1) // m * m


def _forward_kernel(state_ref, action_ref, noise_ref,
                    wmain_ref, bias_ref, w34_ref, out_ref):
    S = state_ref.shape[-1]
    A = action_ref.shape[-1]

    state = state_ref[...]            # [tb, S]
    action = action_ref[...]          # [tb, A]
    noise = noise_ref[...]            # [tb, S]

    # Static, sublane-aligned views into the packed weight / bias slabs.
    w1s = wmain_ref[0:S, :]           # [S, H]
    w1a = wmain_ref[S:S + A, :]       # [A, H]
    w2 = wmain_ref[S + A:, :]         # [H, H]
    b1 = bias_ref[0:1, :]             # [1, H]
    b2 = bias_ref[1:2, :]             # [1, H]
    b34 = bias_ref[2:3, 0:2 * S]      # [1, 2S]

    # fc1 (split matmul replaces concat([state, action]) @ W1) -> relu
    h1 = (jnp.dot(state, w1s, preferred_element_type=jnp.float32)
          + jnp.dot(action, w1a, preferred_element_type=jnp.float32)
          + b1)
    h1 = jnp.maximum(h1, 0.0)

    # fc2 -> relu
    h2 = jnp.dot(h1, w2, preferred_element_type=jnp.float32) + b2
    h2 = jnp.maximum(h2, 0.0)

    # Fused fc3 || fc4 heads: one [H, 2*S] matmul, then split columns.
    heads = jnp.dot(h2, w34_ref[...], preferred_element_type=jnp.float32) + b34
    ds = jnp.tanh(heads[:, :S])
    logvar = heads[:, S:]

    # mu = clamp(0.1 * ds + state, -1, 1)
    mu = jnp.clip(0.1 * ds + state, -1.0, 1.0)

    # reparameterize: z = clamp(mu + noise * exp(0.5 * logvar), -1, 1)
    std = jnp.exp(0.5 * logvar)
    z = jnp.clip(mu + noise * std, -1.0, 1.0)

    # Lane-dense output slab [mu | logvar | z] via static slice stores.
    out_ref[:, 0:S] = mu
    out_ref[:, S:2 * S] = logvar
    out_ref[:, 2 * S:3 * S] = z


def p_forward_model_dg(state, action, noise, params, *, batch_tile=128):
    """state: [B, S], action: [B, A], noise: [B, S] standard normal."""
    w_main, bias, w34 = params
    B, S = state.shape
    A = action.shape[-1]
    H = w34.shape[0]

    # Batch tile: 8 rows minimum (sublane), up to 128 rows per grid step.
    tb = min(batch_tile, _round_up(B, 8))
    Bp = _round_up(B, tb)
    if Bp != B:
        pad = ((0, Bp - B), (0, 0))
        state_p = jnp.pad(state, pad)
        action_p = jnp.pad(action, pad)
        noise_p = jnp.pad(noise, pad)
    else:
        state_p, action_p, noise_p = state, action, noise

    flops = 2 * Bp * ((S + A) * H + H * H + H * 2 * S)
    bytes_accessed = 4 * int(Bp * (2 * S + A)
                             + w_main.size + bias.size + w34.size
                             + Bp * 3 * S)
    cost = pl.CostEstimate(flops=int(flops),
                           transcendentals=int(2 * Bp * S),
                           bytes_accessed=int(bytes_accessed))

    grid = (Bp // tb,)
    # Weight blocks use a constant index_map -> fetched once, VMEM-resident
    # across all batch tiles.
    packed = pl.pallas_call(
        _forward_kernel,
        out_shape=jax.ShapeDtypeStruct((Bp, 3 * S), jnp.float32),
        grid=grid,
        in_specs=[
            pl.BlockSpec((tb, S), lambda i: (i, 0)),
            pl.BlockSpec((tb, A), lambda i: (i, 0)),
            pl.BlockSpec((tb, S), lambda i: (i, 0)),
            pl.BlockSpec(w_main.shape, lambda i: (0, 0)),
            pl.BlockSpec(bias.shape, lambda i: (0, 0)),
            pl.BlockSpec(w34.shape, lambda i: (0, 0)),
        ],
        out_specs=pl.BlockSpec((tb, 3 * S), lambda i: (i, 0)),
        compiler_params=pltpu.CompilerParams(
            dimension_semantics=("parallel",)),
        cost_estimate=cost,
    )(state_p, action_p, noise_p, w_main, bias, w34)

    mu = packed[:B, :S]
    logvar = packed[:B, S:2 * S]
    sample_z = packed[:B, 2 * S:]
    return mu, logvar, sample_z


def _xavier_uniform(key, fan_in, fan_out):
    limit = jnp.sqrt(6.0 / (fan_in + fan_out))
    # Stored as [in, out] (transposed vs PyTorch's [out, in]).
    return jax.random.uniform(key, (fan_in, fan_out), jnp.float32, -limit, limit)


def init_params(key, state_dim, action_dim, hidden=256):
    k1, k2, k3, k4 = jax.random.split(key, 4)
    in_dim = state_dim + action_dim
    w1 = _xavier_uniform(k1, in_dim, hidden)          # fc1: [S+A, H]
    w2 = _xavier_uniform(k2, hidden, hidden)          # fc2: [H, H]
    w3 = _xavier_uniform(k3, hidden, state_dim)       # fc3: [H, S]
    w4 = _xavier_uniform(k4, hidden, state_dim)       # fc4: [H, S]

    # Packed main weight slab: rows [0:S)=w1_state, [S:S+A)=w1_action, rest=w2.
    w_main = jnp.concatenate([w1, w2], axis=0)        # [S+A+H, H]
    # Fused head: [H, 2*S] = fc3 || fc4.
    w34 = jnp.concatenate([w3, w4], axis=1)

    # Packed bias slab [3, H]: row0=b1, row1=b2, row2[:2S]=b3|b4 (zero-init,
    # matching zero_bias=True in the reference).
    b1 = jnp.zeros((hidden,), jnp.float32)
    b2 = jnp.zeros((hidden,), jnp.float32)
    b34 = jnp.zeros((2 * state_dim,), jnp.float32)
    bias = jnp.zeros((3, hidden), jnp.float32)
    bias = bias.at[0].set(b1).at[1].set(b2)
    bias = bias.at[2, :2 * state_dim].set(b34)
    return (w_main, bias, w34)


if __name__ == "__main__":
    state_dim, action_dim, batch = 16, 8, 8

    key = jax.random.PRNGKey(0)
    k_param, k_state, k_action, k_noise = jax.random.split(key, 4)

    params = init_params(k_param, state_dim, action_dim)
    state = jax.random.uniform(k_state, (batch, state_dim), jnp.float32, -1.0, 1.0)
    action = jax.random.uniform(k_action, (batch, action_dim), jnp.float32, -1.0, 1.0)
    noise = jax.random.normal(k_noise, (batch, state_dim), jnp.float32)

    mu, logvar, sample_z = p_forward_model_dg(state, action, noise, params)
    jax.block_until_ready((mu, logvar, sample_z))

    # Sanity check against a pure-JAX reference of the same math.
    w_main, bias, w34 = params
    w1 = w_main[:state_dim + action_dim]
    w2 = w_main[state_dim + action_dim:]
    b1 = bias[0:1, :]
    b2 = bias[1:2, :]
    b34 = bias[2:3, :2 * state_dim]
    w3 = w34[:, :state_dim]
    w4 = w34[:, state_dim:]
    b3 = b34[:, :state_dim]
    b4 = b34[:, state_dim:]

    x = jnp.concatenate([state, action], axis=-1)
    h1 = jnp.maximum(x @ w1 + b1, 0.0)
    h2 = jnp.maximum(h1 @ w2 + b2, 0.0)
    ds = jnp.tanh(h2 @ w3 + b3)
    mu_ref = jnp.clip(0.1 * ds + state, -1.0, 1.0)
    logvar_ref = h2 @ w4 + b4
    z_ref = jnp.clip(mu_ref + noise * jnp.exp(0.5 * logvar_ref), -1.0, 1.0)

    assert jnp.allclose(mu, mu_ref, atol=1e-5)
    assert jnp.allclose(logvar, logvar_ref, atol=1e-5)
    assert jnp.allclose(sample_z, z_ref, atol=1e-5)

    print("KERNEL_OK")
</pallas_src>

<mosaic_0001>
module attributes {stable_mosaic.version = 11 : i64} {
  func.func @_forward_kernel(%arg0: i32, %arg1: memref<8x16xf32, #tpu.memory_space<vmem>>, %arg2: memref<8x8xf32, #tpu.memory_space<vmem>>, %arg3: memref<8x16xf32, #tpu.memory_space<vmem>>, %arg4: memref<280x256xf32, #tpu.memory_space<vmem>>, %arg5: memref<3x256xf32, #tpu.memory_space<vmem>>, %arg6: memref<256x32xf32, #tpu.memory_space<vmem>>, %arg7: memref<8x48xf32, #tpu.memory_space<vmem>>) attributes {dimension_semantics = [#tpu.dimension_semantics<parallel>], iteration_bounds = array<i64: 1>, scalar_prefetch = 0 : i64, scratch_operands = 0 : i64, tpu.core_type = #tpu.core_type<tc>, window_params = [{transform_indices = @transform_0, window_bounds = array<i64: 8, 16>}, {transform_indices = @transform_1, window_bounds = array<i64: 8, 8>}, {transform_indices = @transform_2, window_bounds = array<i64: 8, 16>}, {pipeline_mode = #tpu.pipeline_mode<synchronous>, transform_indices = @transform_3, window_bounds = array<i64: 280, 256>}, {pipeline_mode = #tpu.pipeline_mode<synchronous>, transform_indices = @transform_4, window_bounds = array<i64: 3, 256>}, {pipeline_mode = #tpu.pipeline_mode<synchronous>, transform_indices = @transform_5, window_bounds = array<i64: 256, 32>}, {transform_indices = @transform_6, window_bounds = array<i64: 8, 48>}]} {
    %c0 = arith.constant 0 : index
    %c0_0 = arith.constant 0 : index
    %0 = vector.load %arg1[%c0, %c0_0] : memref<8x16xf32, #tpu.memory_space<vmem>>, vector<8x16xf32>
    %c0_1 = arith.constant 0 : index
    %c0_2 = arith.constant 0 : index
    %1 = vector.load %arg2[%c0_1, %c0_2] : memref<8x8xf32, #tpu.memory_space<vmem>>, vector<8x8xf32>
    %c0_3 = arith.constant 0 : index
    %c0_4 = arith.constant 0 : index
    %2 = vector.load %arg3[%c0_3, %c0_4] : memref<8x16xf32, #tpu.memory_space<vmem>>, vector<8x16xf32>
    %c0_5 = arith.constant 0 : index
    %c0_6 = arith.constant 0 : index
    %3 = vector.load %arg4[%c0_5, %c0_6] : memref<280x256xf32, #tpu.memory_space<vmem>>, vector<16x256xf32>
    %c16 = arith.constant 16 : index
    %c0_7 = arith.constant 0 : index
    %4 = vector.load %arg4[%c16, %c0_7] : memref<280x256xf32, #tpu.memory_space<vmem>>, vector<8x256xf32>
    %c24 = arith.constant 24 : index
    %c0_8 = arith.constant 0 : index
    %5 = vector.load %arg4[%c24, %c0_8] : memref<280x256xf32, #tpu.memory_space<vmem>>, vector<256x256xf32>
    %c0_9 = arith.constant 0 : index
    %c0_10 = arith.constant 0 : index
    %6 = vector.load %arg5[%c0_9, %c0_10] : memref<3x256xf32, #tpu.memory_space<vmem>>, vector<1x256xf32>
    %c1 = arith.constant 1 : index
    %c0_11 = arith.constant 0 : index
    %7 = vector.load %arg5[%c1, %c0_11] : memref<3x256xf32, #tpu.memory_space<vmem>>, vector<1x256xf32>
    %c2 = arith.constant 2 : index
    %c0_12 = arith.constant 0 : index
    %8 = vector.load %arg5[%c2, %c0_12] : memref<3x256xf32, #tpu.memory_space<vmem>>, vector<1x32xf32>
    %cst = arith.constant dense<0.000000e+00> : vector<8x256xf32>
    %9 = tpu.matmul %0, %3, %cst {dimension_numbers = #tpu.dot_dimension_numbers<[1], [0], [0], [1], [0, 0, 1, 1], [], []>} : vector<8x16xf32>, vector<16x256xf32>, vector<8x256xf32> -> vector<8x256xf32>
    %cst_13 = arith.constant dense<0.000000e+00> : vector<8x256xf32>
    %10 = tpu.matmul %1, %4, %cst_13 {dimension_numbers = #tpu.dot_dimension_numbers<[1], [0], [0], [1], [0, 0, 1, 1], [], []>} : vector<8x8xf32>, vector<8x256xf32>, vector<8x256xf32> -> vector<8x256xf32>
    %11 = arith.addf %9, %10 : vector<8x256xf32>
    %12 = vector.broadcast %6 : vector<1x256xf32> to vector<8x256xf32>
    %13 = arith.addf %11, %12 : vector<8x256xf32>
    %cst_14 = arith.constant 0.000000e+00 : f32
    %14 = vector.broadcast %cst_14 : f32 to vector<8x256xf32>
    %15 = arith.maximumf %13, %14 : vector<8x256xf32>
    %cst_15 = arith.constant dense<0.000000e+00> : vector<8x256xf32>
    %16 = tpu.matmul %15, %5, %cst_15 {dimension_numbers = #tpu.dot_dimension_numbers<[1], [0], [0], [1], [0, 0, 1, 1], [], []>} : vector<8x256xf32>, vector<256x256xf32>, vector<8x256xf32> -> vector<8x256xf32>
    %17 = vector.broadcast %7 : vector<1x256xf32> to vector<8x256xf32>
    %18 = arith.addf %16, %17 : vector<8x256xf32>
    %cst_16 = arith.constant 0.000000e+00 : f32
    %19 = vector.broadcast %cst_16 : f32 to vector<8x256xf32>
    %20 = arith.maximumf %18, %19 : vector<8x256xf32>
    %c0_17 = arith.constant 0 : index
    %c0_18 = arith.constant 0 : index
    %21 = vector.load %arg6[%c0_17, %c0_18] : memref<256x32xf32, #tpu.memory_space<vmem>>, vector<256x32xf32>
    %cst_19 = arith.constant dense<0.000000e+00> : vector<8x32xf32>
    %22 = tpu.matmul %20, %21, %cst_19 {dimension_numbers = #tpu.dot_dimension_numbers<[1], [0], [0], [1], [0, 0, 1, 1], [], []>} : vector<8x256xf32>, vector<256x32xf32>, vector<8x32xf32> -> vector<8x32xf32>
    %23 = vector.broadcast %8 : vector<1x32xf32> to vector<8x32xf32>
    %24 = arith.addf %22, %23 : vector<8x32xf32>
    %25 = vector.extract_strided_slice %24 {offsets = [0, 0], sizes = [8, 16], strides = [1, 1]} : vector<8x32xf32> to vector<8x16xf32>
    %26 = math.tanh %25 : vector<8x16xf32>
    %27 = vector.extract_strided_slice %24 {offsets = [0, 16], sizes = [8, 16], strides = [1, 1]} : vector<8x32xf32> to vector<8x16xf32>
    %cst_20 = arith.constant 1.000000e-01 : f32
    %28 = vector.broadcast %cst_20 : f32 to vector<8x16xf32>
    %29 = arith.mulf %28, %26 : vector<8x16xf32>
    %30 = arith.addf %29, %0 : vector<8x16xf32>
    %cst_21 = arith.constant -1.000000e+00 : f32
    %cst_22 = arith.constant 1.000000e+00 : f32
    %31 = vector.broadcast %cst_21 : f32 to vector<8x16xf32>
    %32 = arith.maximumf %31, %30 : vector<8x16xf32>
    %33 = vector.broadcast %cst_22 : f32 to vector<8x16xf32>
    %34 = arith.minimumf %33, %32 : vector<8x16xf32>
    %cst_23 = arith.constant 5.000000e-01 : f32
    %35 = vector.broadcast %cst_23 : f32 to vector<8x16xf32>
    %36 = arith.mulf %35, %27 : vector<8x16xf32>
    %37 = math.exp %36 : vector<8x16xf32>
    %38 = arith.mulf %2, %37 : vector<8x16xf32>
    %39 = arith.addf %34, %38 : vector<8x16xf32>
    %cst_24 = arith.constant -1.000000e+00 : f32
    %cst_25 = arith.constant 1.000000e+00 : f32
    %40 = vector.broadcast %cst_24 : f32 to vector<8x16xf32>
    %41 = arith.maximumf %40, %39 : vector<8x16xf32>
    %42 = vector.broadcast %cst_25 : f32 to vector<8x16xf32>
    %43 = arith.minimumf %42, %41 : vector<8x16xf32>
    %c0_26 = arith.constant 0 : index
    %c0_27 = arith.constant 0 : index
    %44 = vector.load %arg7[%c0_26, %c0_27] : memref<8x48xf32, #tpu.memory_space<vmem>>, vector<8x16xf32>
    tpu.vector_store %arg7[%c0_26, %c0_27], %34 {strides = array<i32>} : memref<8x48xf32, #tpu.memory_space<vmem>>, vector<8x16xf32>,
    %c0_28 = arith.constant 0 : index
    %c16_29 = arith.constant 16 : index
    %45 = vector.load %arg7[%c0_28, %c16_29] : memref<8x48xf32, #tpu.memory_space<vmem>>, vector<8x16xf32>
    tpu.vector_store %arg7[%c0_28, %c16_29], %27 {strides = array<i32>} : memref<8x48xf32, #tpu.memory_space<vmem>>, vector<8x16xf32>,
    %c0_30 = arith.constant 0 : index
    %c32 = arith.constant 32 : index
    %46 = vector.load %arg7[%c0_30, %c32] : memref<8x48xf32, #tpu.memory_space<vmem>>, vector<8x16xf32>
    tpu.vector_store %arg7[%c0_30, %c32], %43 {strides = array<i32>} : memref<8x48xf32, #tpu.memory_space<vmem>>, vector<8x16xf32>,
    return
  }
  func.func @transform_0(%arg0: i32) -> (i32, i32) {
    %c0_i32 = arith.constant 0 : i32
    %c0_i32_0 = arith.constant 0 : i32
    return %arg0, %c0_i32 : i32, i32
  }
  func.func @transform_1(%arg0: i32) -> (i32, i32) {
    %c0_i32 = arith.constant 0 : i32
    %c0_i32_0 = arith.constant 0 : i32
    return %arg0, %c0_i32 : i32, i32
  }
  func.func @transform_2(%arg0: i32) -> (i32, i32) {
    %c0_i32 = arith.constant 0 : i32
    %c0_i32_0 = arith.constant 0 : i32
    return %arg0, %c0_i32 : i32, i32
  }
  func.func @transform_3(%arg0: i32) -> (i32, i32) {
    %c0_i32 = arith.constant 0 : i32
    %c0_i32_0 = arith.constant 0 : i32
    %c0_i32_1 = arith.constant 0 : i32
    return %c0_i32, %c0_i32_0 : i32, i32
  }
  func.func @transform_4(%arg0: i32) -> (i32, i32) {
    %c0_i32 = arith.constant 0 : i32
    %c0_i32_0 = arith.constant 0 : i32
    %c0_i32_1 = arith.constant 0 : i32
    return %c0_i32, %c0_i32_0 : i32, i32
  }
  func.func @transform_5(%arg0: i32) -> (i32, i32) {
    %c0_i32 = arith.constant 0 : i32
    %c0_i32_0 = arith.constant 0 : i32
    %c0_i32_1 = arith.constant 0 : i32
    return %c0_i32, %c0_i32_0 : i32, i32
  }
  func.func @transform_6(%arg0: i32) -> (i32, i32) {
    %c0_i32 = arith.constant 0 : i32
    %c0_i32_0 = arith.constant 0 : i32
    return %arg0, %c0_i32 : i32, i32
  }
}

</mosaic_0001>

<llo_original>
// kernel: tpu_custom_call.1
$region0: #{tpu_custom_call.1}
  #allocation0 [shape = 'u32[]', space=smem, size = 0x4, offset = 0x4, fixed_abs, tag = 'smem constant byte address 0x4 - core index']
  #allocation1 [shape = 'u32[144,128]{1,0:T(1,128)}', space=vmem, size = 0x12000, scoped, tag = 'internal scratch']
  %s0 = inlined_call_operand.vmem [shape: f32[8,16], index: 0, kind: input, shape index: {}]
  %s1 = inlined_call_operand.vmem [shape: f32[8,8], index: 1, kind: input, shape index: {}]
  %s2 = inlined_call_operand.vmem [shape: f32[8,16], index: 2, kind: input, shape index: {}]
  %s3 = inlined_call_operand.hbm [shape: f32[280,256], index: 3, kind: input, shape index: {}]
  %s4 = inlined_call_operand.vmem [shape: f32[3,256], index: 4, kind: input, shape index: {}]
  %s5 = inlined_call_operand.vmem [shape: f32[256,32], index: 5, kind: input, shape index: {}]
  %s6 = inlined_call_operand.hbm [shape: f32[8,48], index: 6, kind: output, shape index: {}]
  %s7 = sld [smem:[#allocation0]]
  $region38: #{tpu_custom_call.1} parent=0
    _
  %s9 = ssub.s32 1, %s7
  %s10 = scalar_select 0, %s9, %s7
  $region1: #{tpu_custom_call.1} parent=0
    #allocation2 [shape = 'u8[286720]{0}', space=vmem, size = 0x46000, scoped, tag = 'input window, operand 3, single buffered']
    #allocation3 [shape = 's32[1]{0}', space=sflag, size = 0x4, scoped, tag = 'scoped memory for tpu_custom_call.1']
    #allocation4 [shape = 's32[1]{0}', space=sflag, size = 0x4, scoped, tag = 'scoped memory for tpu_custom_call.1']
    #allocation5 [shape = 'u8[4096]{0}', space=vmem, size = 0x1000, scoped, tag = 'output window, operand 0, single buffered']
    %11 = vsyncpa [#allocation3], 0
    %12 = vsyncpa [#allocation4], 0
    // Predicated region
    $region2: #{tpu_custom_call.1} parent=1 // pred_check
      _
    $region3: #{tpu_custom_call.1} parent=1 // pred_check_branch
      %14 = sbr.rel (0) target = $region5
    $region4: #{tpu_custom_call.1} parent=1 // pred_region
      _
    $region5: #{tpu_custom_call.1} parent=1 // pred_fallthru
      _
    // Predicated region
    $region6: #{tpu_custom_call.1} parent=1 // pred_check
      _
    $region7: #{tpu_custom_call.1} parent=1 // pred_check_branch
      %16 = sbr.rel (0) target = $region9
    $region8: #{tpu_custom_call.1} parent=1 // pred_region
      _
    $region9: #{tpu_custom_call.1} parent=1 // pred_fallthru
      _
    // Predicated region
    $region10: #{tpu_custom_call.1} parent=1 // pred_check
      _
    $region11: #{tpu_custom_call.1} parent=1 // pred_check_branch
      %18 = sbr.rel (0) target = $region13
    $region12: #{tpu_custom_call.1} parent=1 // pred_region
      _
    $region13: #{tpu_custom_call.1} parent=1 // pred_fallthru
      _
    // Predicated region
    $region14: #{tpu_custom_call.1} parent=1 // pred_check
      _
    $region15: #{tpu_custom_call.1} parent=1 // pred_check_branch
      %20 = sbr.rel (0) target = $region17
    $region16: #{tpu_custom_call.1} parent=1 // pred_region
      %s22 = ssub.s32 8960, 8960
      %23 = vsyncadd [#allocation3], %s22
      %s24 = sshll.u32 [#allocation2], 4
      %s25 = int_to_ptr.vmem [resolvable:$true] %s24
      %30 = dma.hbm_to_vmem [thread:$0]  %s3, 8960, %s25, [#allocation3], 256, 256, 16
    $region17: #{tpu_custom_call.1} parent=1 // pred_fallthru
      _
    // Predicated region
    $region18: #{tpu_custom_call.1} parent=1 // pred_check
      _
    $region19: #{tpu_custom_call.1} parent=1 // pred_check_branch
      %32 = sbr.rel (0) target = $region21
    $region20: #{tpu_custom_call.1} parent=1 // pred_region
      _
    $region21: #{tpu_custom_call.1} parent=1 // pred_fallthru
      _
    // Predicated region
    $region22: #{tpu_custom_call.1} parent=1 // pred_check
      _
    $region23: #{tpu_custom_call.1} parent=1 // pred_check_branch
      %34 = sbr.rel (0) target = $region25
    $region24: #{tpu_custom_call.1} parent=1 // pred_region
      _
    $region25: #{tpu_custom_call.1} parent=1 // pred_fallthru
      _
    // Predicated region
    $region26: #{tpu_custom_call.1} parent=1 // pred_check
      _
    $region27: #{tpu_custom_call.1} parent=1 // pred_check_branch
      %36 = sbr.rel (0) target = $region29
    $region28: #{tpu_custom_call.1} parent=1 // pred_region
      %37 = dma.done [#allocation3], 8960
    $region29: #{tpu_custom_call.1} parent=1 // pred_fallthru
      _
    %v38 = vld [vmem:[%s0] sm:$0xff]
    %v39 = vld [vmem:[%s1] sm:$0xff]
    %v40 = vld [vmem:[%s2] sm:$0xff]
    %v41 = vld [vmem:[#allocation2] sm:$0xff]
    %v42 = vld [vmem:[#allocation2 + $0x8] sm:$0xff]
    %v43 = vld [vmem:[#allocation2 + $0x10] sm:$0xff]
    %v44 = vld [vmem:[#allocation2 + $0x18] sm:$0xff]
    %v45 = vld [vmem:[#allocation2 + $0x20] sm:$0xff]
    %v46 = vld [vmem:[#allocation2 + $0x28] sm:$0xff]
    %v47 = vld [vmem:[#allocation2 + $0x30] sm:$0xff]
    %v48 = vld [vmem:[#allocation2 + $0x38] sm:$0xff]
    %v49 = vld [vmem:[#allocation2 + $0x40] sm:$0xff]
    %v50 = vld [vmem:[#allocation2 + $0x48] sm:$0xff]
    %v51 = vld [vmem:[#allocation2 + $0x50] sm:$0xff]
    %v52 = vld [vmem:[#allocation2 + $0x58] sm:$0xff]
    %v53 = vld [vmem:[#allocation2 + $0x60] sm:$0xff]
    %v54 = vld [vmem:[#allocation2 + $0x68] sm:$0xff]
    %v55 = vld [vmem:[#allocation2 + $0x70] sm:$0xff]
    %v56 = vld [vmem:[#allocation2 + $0x78] sm:$0xff]
    %v57 = vld [vmem:[#allocation2 + $0x80] sm:$0xff]
    %v58 = vld [vmem:[#allocation2 + $0x88] sm:$0xff]
    %v59 = vld [vmem:[#allocation2 + $0x90] sm:$0xff]
    %v60 = vld [vmem:[#allocation2 + $0x98] sm:$0xff]
    %v61 = vld [vmem:[#allocation2 + $0xa0] sm:$0xff]
    %v62 = vld [vmem:[#allocation2 + $0xa8] sm:$0xff]
    %v63 = vld [vmem:[#allocation2 + $0xb0] sm:$0xff]
    %v64 = vld [vmem:[#allocation2 + $0xb8] sm:$0xff]
    %v65 = vld [vmem:[#allocation2 + $0xc0] sm:$0xff]
    %v66 = vld [vmem:[#allocation2 + $0xc8] sm:$0xff]
    %v67 = vld [vmem:[#allocation2 + $0xd0] sm:$0xff]
    %v68 = vld [vmem:[#allocation2 + $0xd8] sm:$0xff]
    %v69 = vld [vmem:[#allocation2 + $0xe0] sm:$0xff]
    %v70 = vld [vmem:[#allocation2 + $0xe8] sm:$0xff]
    %v71 = vld [vmem:[#allocation2 + $0xf0] sm:$0xff]
    %v72 = vld [vmem:[#allocation2 + $0xf8] sm:$0xff]
    %v73 = vld [vmem:[#allocation2 + $0x100] sm:$0xff]
    %v74 = vld [vmem:[#allocation2 + $0x108] sm:$0xff]
    %v75 = vld [vmem:[#allocation2 + $0x110] sm:$0xff]
    %v76 = vld [vmem:[#allocation2 + $0x118] sm:$0xff]
    %v77 = vld [vmem:[#allocation2 + $0x120] sm:$0xff]
    %v78 = vld [vmem:[#allocation2 + $0x128] sm:$0xff]
    %v79 = vld [vmem:[#allocation2 + $0x130] sm:$0xff]
    %v80 = vld [vmem:[#allocation2 + $0x138] sm:$0xff]
    %v81 = vld [vmem:[#allocation2 + $0x140] sm:$0xff]
    %v82 = vld [vmem:[#allocation2 + $0x148] sm:$0xff]
    %v83 = vld [vmem:[#allocation2 + $0x150] sm:$0xff]
    %v84 = vld [vmem:[#allocation2 + $0x158] sm:$0xff]
    %v85 = vld [vmem:[#allocation2 + $0x160] sm:$0xff]
    %v86 = vld [vmem:[#allocation2 + $0x168] sm:$0xff]
    %v87 = vld [vmem:[#allocation2 + $0x170] sm:$0xff]
    %v88 = vld [vmem:[#allocation2 + $0x178] sm:$0xff]
    %v89 = vld [vmem:[#allocation2 + $0x180] sm:$0xff]
    %v90 = vld [vmem:[#allocation2 + $0x188] sm:$0xff]
    %v91 = vld [vmem:[#allocation2 + $0x190] sm:$0xff]
    %v92 = vld [vmem:[#allocation2 + $0x198] sm:$0xff]
    %v93 = vld [vmem:[#allocation2 + $0x1a0] sm:$0xff]
    %v94 = vld [vmem:[#allocation2 + $0x1a8] sm:$0xff]
    %v95 = vld [vmem:[#allocation2 + $0x1b0] sm:$0xff]
    %v96 = vld [vmem:[#allocation2 + $0x1b8] sm:$0xff]
    %v97 = vld [vmem:[#allocation2 + $0x1c0] sm:$0xff]
    %v98 = vld [vmem:[#allocation2 + $0x1c8] sm:$0xff]
    %v99 = vld [vmem:[#allocation2 + $0x1d0] sm:$0xff]
    %v100 = vld [vmem:[#allocation2 + $0x1d8] sm:$0xff]
    %v101 = vld [vmem:[#allocation2 + $0x1e0] sm:$0xff]
    %v102 = vld [vmem:[#allocation2 + $0x1e8] sm:$0xff]
    %v103 = vld [vmem:[#allocation2 + $0x1f0] sm:$0xff]
    %v104 = vld [vmem:[#allocation2 + $0x1f8] sm:$0xff]
    %v105 = vld [vmem:[#allocation2 + $0x200] sm:$0xff]
    %v106 = vld [vmem:[#allocation2 + $0x208] sm:$0xff]
    %v107 = vld [vmem:[#allocation2 + $0x210] sm:$0xff]
    %v108 = vld [vmem:[#allocation2 + $0x218] sm:$0xff]
    %v109 = vld [vmem:[#allocation2 + $0x220] sm:$0xff]
    %v110 = vld [vmem:[#allocation2 + $0x228] sm:$0xff]
    %v111 = vld [vmem:[%s4] ss:$4 sm:$0x3]
    %s112 = scalar_lea.vmem %s4, 1
    %v113 = vld [vmem:[%s112] ss:$4 sm:$0x3]
    %v114 = vld [vmem:[%s4 + $0x2] sm:$0x1]
    %vm115 = vcmask 64512
    %v117 = vsel %vm115, %v39, 0
    %119 = vmatprep.subr.mxu0 %v46
    %120 = vmatpush1.msra.mxu0 %v45
    %121 = vmatprep.subr.mxu0 0.0
    %122 = vmatpush1.msra.mxu0 0.0
    %123 = vmatprep.subr.mxu0 0.0
    %124 = vmatpush1.msra.mxu0 0.0
    %125 = vmatprep.subr.mxu0 0.0
    %126 = vmatpush1.msra.mxu0 0.0
    %127 = vmatprep.subr.mxu0 0.0
    %128 = vmatpush1.msra.mxu0 0.0
    %129 = vmatprep.subr.mxu0 0.0
    %130 = vmatpush1.msra.mxu0 0.0
    %131 = vmatprep.subr.mxu0 0.0
    %132 = vmatpush1.msra.mxu0 0.0
    %133 = vmatprep.subr.mxu0 0.0
    %134 = vmatpush1.msra.mxu0 0.0
    %135 = vmatprep.subr.mxu0 0.0
    %136 = vmatpush1.msra.mxu0 0.0
    %137 = vmatprep.subr.mxu0 0.0
    %138 = vmatpush1.msra.mxu0 0.0
    %139 = vmatprep.subr.mxu0 0.0
    %140 = vmatpush1.msra.mxu0 0.0
    %141 = vmatprep.subr.mxu0 0.0
    %142 = vmatpush1.msra.mxu0 0.0
    %143 = vmatprep.subr.mxu0 0.0
    %144 = vmatpush1.msra.mxu0 0.0
    %145 = vmatprep.subr.mxu0 0.0
    %146 = vmatpush1.msra.mxu0 0.0
    %147 = vmatprep.subr.mxu0 0.0
    %148 = vmatpush1.msra.mxu0 0.0
    %149 = vmatprep.subr.mxu0 0.0
    %150 = vmatpush1.msra.mxu0 0.0
    %151 = vmatprep.subr.mxu0 0.0
    %152 = vmatpush1.msra.mxu0 0.0
    %153 = vmatprep.subr.mxu0 0.0
    %154 = vmatpush1.msra.mxu0 0.0
    %155 = vmatprep.subr.mxu0 0.0
    %156 = vmatpush1.msra.mxu0 0.0
    %157 = vmatprep.subr.mxu0 0.0
    %158 = vmatpush1.msra.mxu0 0.0
    %159 = vmatprep.subr.mxu0 0.0
    %160 = vmatpush1.msra.mxu0 0.0
    %161 = vmatprep.subr.mxu0 0.0
    %162 = vmatpush1.msra.mxu0 0.0
    %163 = vmatprep.subr.mxu0 0.0
    %164 = vmatpush1.msra.mxu0 0.0
    %165 = vmatprep.subr.mxu0 0.0
    %166 = vmatpush1.msra.mxu0 0.0
    %167 = vmatprep.subr.mxu0 0.0
    %168 = vmatpush1.msra.mxu0 0.0
    %169 = vmatprep.subr.mxu0 0.0
    %170 = vmatpush1.msra.mxu0 0.0
    %171 = vmatprep.subr.mxu0 0.0
    %172 = vmatpush1.msra.mxu0 0.0
    %173 = vmatprep.subr.mxu0 0.0
    %174 = vmatpush1.msra.mxu0 0.0
    %175 = vmatprep.subr.mxu0 0.0
    %176 = vmatpush1.msra.mxu0 0.0
    %177 = vmatprep.subr.mxu0 0.0
    %178 = vmatpush1.msra.mxu0 0.0
    %179 = vmatprep.subr.mxu0 0.0
    %180 = vmatpush1.msra.mxu0 0.0
    %181 = vmatprep.subr.mxu0 0.0
    %182 = vmatpush1.msra.mxu0 0.0
    %183 = vmatprep.mubr.f32.mxu0 0.0
    %184 = vmatmul.mubr.f32.gmra.mrb[0].mxu0 %v117
    %v185 = vpop.f32.mrb[0].mxu0
    %v186 = vadd.f32 0.0, %v185
    %v187 = vpop.f32.mrb[0].mxu0
    %v188 = vadd.f32 0.0, %v187
    %189 = vdwg.mxu0
    %vm190 = vcmask 130048
    %v192 = vsel %vm190, %v38, 0
    %194 = vmatprep.subr.mxu0 %v42
    %195 = vmatpush1.msra.mxu0 %v41
    %196 = vmatprep.subr.mxu0 %v44
    %197 = vmatpush1.msra.mxu0 %v43
    %198 = vmatprep.subr.mxu0 0.0
    %199 = vmatpush1.msra.mxu0 0.0
    %200 = vmatprep.subr.mxu0 0.0
    %201 = vmatpush1.msra.mxu0 0.0
    %202 = vmatprep.subr.mxu0 0.0
    %203 = vmatpush1.msra.mxu0 0.0
    %204 = vmatprep.subr.mxu0 0.0
    %205 = vmatpush1.msra.mxu0 0.0
    %206 = vmatprep.subr.mxu0 0.0
    %207 = vmatpush1.msra.mxu0 0.0
    %208 = vmatprep.subr.mxu0 0.0
    %209 = vmatpush1.msra.mxu0 0.0
    %210 = vmatprep.subr.mxu0 0.0
    %211 = vmatpush1.msra.mxu0 0.0
    %212 = vmatprep.subr.mxu0 0.0
    %213 = vmatpush1.msra.mxu0 0.0
    %214 = vmatprep.subr.mxu0 0.0
    %215 = vmatpush1.msra.mxu0 0.0
    %216 = vmatprep.subr.mxu0 0.0
    %217 = vmatpush1.msra.mxu0 0.0
    %218 = vmatprep.subr.mxu0 0.0
    %219 = vmatpush1.msra.mxu0 0.0
    %220 = vmatprep.subr.mxu0 0.0
    %221 = vmatpush1.msra.mxu0 0.0
    %222 = vmatprep.subr.mxu0 0.0
    %223 = vmatpush1.msra.mxu0 0.0
    %224 = vmatprep.subr.mxu0 0.0
    %225 = vmatpush1.msra.mxu0 0.0
    %226 = vmatprep.subr.mxu0 0.0
    %227 = vmatpush1.msra.mxu0 0.0
    %228 = vmatprep.subr.mxu0 0.0
    %229 = vmatpush1.msra.mxu0 0.0
    %230 = vmatprep.subr.mxu0 0.0
    %231 = vmatpush1.msra.mxu0 0.0
    %232 = vmatprep.subr.mxu0 0.0
    %233 = vmatpush1.msra.mxu0 0.0
    %234 = vmatprep.subr.mxu0 0.0
    %235 = vmatpush1.msra.mxu0 0.0
    %236 = vmatprep.subr.mxu0 0.0
    %237 = vmatpush1.msra.mxu0 0.0
    %238 = vmatprep.subr.mxu0 0.0
    %239 = vmatpush1.msra.mxu0 0.0
    %240 = vmatprep.subr.mxu0 0.0
    %241 = vmatpush1.msra.mxu0 0.0
    %242 = vmatprep.subr.mxu0 0.0
    %243 = vmatpush1.msra.mxu0 0.0
    %244 = vmatprep.subr.mxu0 0.0
    %245 = vmatpush1.msra.mxu0 0.0
    %246 = vmatprep.subr.mxu0 0.0
    %247 = vmatpush1.msra.mxu0 0.0
    %248 = vmatprep.subr.mxu0 0.0
    %249 = vmatpush1.msra.mxu0 0.0
    %250 = vmatprep.subr.mxu0 0.0
    %251 = vmatpush1.msra.mxu0 0.0
    %252 = vmatprep.subr.mxu0 0.0
    %253 = vmatpush1.msra.mxu0 0.0
    %254 = vmatprep.subr.mxu0 0.0
    %255 = vmatpush1.msra.mxu0 0.0
    %256 = vmatprep.subr.mxu0 0.0
    %257 = vmatpush1.msra.mxu0 0.0
    %258 = vmatprep.mubr.f32.mxu0 0.0
    %259 = vmatmul.mubr.f32.gmra.mrb[0].mxu0 %v192
    %v260 = vpop.f32.mrb[0].mxu0
    %v261 = vadd.f32 %v186, %v260
    %v262 = vpop.f32.mrb[0].mxu0
    %v263 = vadd.f32 %v188, %v262
    %264 = vdwg.mxu0
    %v266 = vlaneseq
    %v267 = vshrl.u32 %v266, 7
    %v268 = vsub.s32 0, %v267
    %v269 = vrot.slane %v111, %v268
    %v270 = vlaneseq
    %v271 = vshrl.u32 %v270, 7
    %v272 = vsub.s32 1, %v271
    %v273 = vrot.slane %v111, %v272
    %v276 = vadd.f32 %v261, %v269
    %v277 = vadd.f32 %v263, %v273
    %v278 = vmax.f32 %v276, 0.0
    %v279 = vmax.f32 %v277, 0.0
    %v281 = vlaneseq
    %v282 = vshrl.u32 %v281, 7
    %v283 = vsub.s32 0, %v282
    %v284 = vrot.slane %v113, %v283
    %v285 = vlaneseq
    %v286 = vshrl.u32 %v285, 7
    %v287 = vsub.s32 1, %v286
    %v288 = vrot.slane %v113, %v287
    %291 = vmatprep.subr.mxu0 %v48
    %292 = vmatpush1.msra.mxu0 %v47
    %293 = vmatprep.subr.mxu0 %v50
    %294 = vmatpush1.msra.mxu0 %v49
    %295 = vmatprep.subr.mxu0 %v52
    %296 = vmatpush1.msra.mxu0 %v51
    %297 = vmatprep.subr.mxu0 %v54
    %298 = vmatpush1.msra.mxu0 %v53
    %299 = vmatprep.subr.mxu0 %v56
    %300 = vmatpush1.msra.mxu0 %v55
    %301 = vmatprep.subr.mxu0 %v58
    %302 = vmatpush1.msra.mxu0 %v57
    %303 = vmatprep.subr.mxu0 %v60
    %304 = vmatpush1.msra.mxu0 %v59
    %305 = vmatprep.subr.mxu0 %v62
    %306 = vmatpush1.msra.mxu0 %v61
    %307 = vmatprep.subr.mxu0 %v64
    %308 = vmatpush1.msra.mxu0 %v63
    %309 = vmatprep.subr.mxu0 %v66
    %310 = vmatpush1.msra.mxu0 %v65
    %311 = vmatprep.subr.mxu0 %v68
    %312 = vmatpush1.msra.mxu0 %v67
    %313 = vmatprep.subr.mxu0 %v70
    %314 = vmatpush1.msra.mxu0 %v69
    %315 = vmatprep.subr.mxu0 %v72
    %316 = vmatpush1.msra.mxu0 %v71
    %317 = vmatprep.subr.mxu0 %v74
    %318 = vmatpush1.msra.mxu0 %v73
    %319 = vmatprep.subr.mxu0 %v76
    %320 = vmatpush1.msra.mxu0 %v75
    %321 = vmatprep.subr.mxu0 %v78
    %322 = vmatpush1.msra.mxu0 %v77
    %323 = vmatprep.subr.mxu0 %v80
    %324 = vmatpush1.msra.mxu0 %v79
    %325 = vmatprep.subr.mxu0 %v82
    %326 = vmatpush1.msra.mxu0 %v81
    %327 = vmatprep.subr.mxu0 %v84
    %328 = vmatpush1.msra.mxu0 %v83
    %329 = vmatprep.subr.mxu0 %v86
    %330 = vmatpush1.msra.mxu0 %v85
    %331 = vmatprep.subr.mxu0 %v88
    %332 = vmatpush1.msra.mxu0 %v87
    %333 = vmatprep.subr.mxu0 %v90
    %334 = vmatpush1.msra.mxu0 %v89
    %335 = vmatprep.subr.mxu0 %v92
    %336 = vmatpush1.msra.mxu0 %v91
    %337 = vmatprep.subr.mxu0 %v94
    %338 = vmatpush1.msra.mxu0 %v93
    %339 = vmatprep.subr.mxu0 %v96
    %340 = vmatpush1.msra.mxu0 %v95
    %341 = vmatprep.subr.mxu0 %v98
    %342 = vmatpush1.msra.mxu0 %v97
    %343 = vmatprep.subr.mxu0 %v100
    %344 = vmatpush1.msra.mxu0 %v99
    %345 = vmatprep.subr.mxu0 %v102
    %346 = vmatpush1.msra.mxu0 %v101
    %347 = vmatprep.subr.mxu0 %v104
    %348 = vmatpush1.msra.mxu0 %v103
    %349 = vmatprep.subr.mxu0 %v106
    %350 = vmatpush1.msra.mxu0 %v105
    %351 = vmatprep.subr.mxu0 %v108
    %352 = vmatpush1.msra.mxu0 %v107
    %353 = vmatprep.subr.mxu0 %v110
    %354 = vmatpush1.msra.mxu0 %v109
    %355 = vmatprep.mubr.f32.mxu0 %v279
    %356 = vmatmul.mubr.f32.gmra.mrb[0].mxu0 %v278
    %v357 = vpop.f32.mrb[0].mxu0
    %v358 = vadd.f32 %v284, %v357
    %v359 = vpop.f32.mrb[0].mxu0
    %v360 = vadd.f32 %v288, %v359
    %361 = vdwg.mxu0
    %v362 = vmax.f32 %v358, 0.0
    %v363 = vmax.f32 %v360, 0.0
    %v364 = vld [vmem:[%s5] sm:$0xff]
    %v365 = vld [vmem:[%s5 + $0x8] sm:$0xff]
    %v366 = vld [vmem:[%s5 + $0x10] sm:$0xff]
    %v367 = vld [vmem:[%s5 + $0x18] sm:$0xff]
    %v368 = vld [vmem:[%s5 + $0x20] sm:$0xff]
    %v369 = vld [vmem:[%s5 + $0x28] sm:$0xff]
    %v370 = vld [vmem:[%s5 + $0x30] sm:$0xff]
    %v371 = vld [vmem:[%s5 + $0x38] sm:$0xff]
    %v372 = vld [vmem:[%s5 + $0x40] sm:$0xff]
    %v373 = vld [vmem:[%s5 + $0x48] sm:$0xff]
    %v374 = vld [vmem:[%s5 + $0x50] sm:$0xff]
    %v375 = vld [vmem:[%s5 + $0x58] sm:$0xff]
    %v376 = vld [vmem:[%s5 + $0x60] sm:$0xff]
    %v377 = vld [vmem:[%s5 + $0x68] sm:$0xff]
    %v378 = vld [vmem:[%s5 + $0x70] sm:$0xff]
    %v379 = vld [vmem:[%s5 + $0x78] sm:$0xff]
    %v380 = vld [vmem:[%s5 + $0x80] sm:$0xff]
    %v381 = vld [vmem:[%s5 + $0x88] sm:$0xff]
    %v382 = vld [vmem:[%s5 + $0x90] sm:$0xff]
    %v383 = vld [vmem:[%s5 + $0x98] sm:$0xff]
    %v384 = vld [vmem:[%s5 + $0xa0] sm:$0xff]
    %v385 = vld [vmem:[%s5 + $0xa8] sm:$0xff]
    %v386 = vld [vmem:[%s5 + $0xb0] sm:$0xff]
    %v387 = vld [vmem:[%s5 + $0xb8] sm:$0xff]
    %v388 = vld [vmem:[%s5 + $0xc0] sm:$0xff]
    %v389 = vld [vmem:[%s5 + $0xc8] sm:$0xff]
    %v390 = vld [vmem:[%s5 + $0xd0] sm:$0xff]
    %v391 = vld [vmem:[%s5 + $0xd8] sm:$0xff]
    %v392 = vld [vmem:[%s5 + $0xe0] sm:$0xff]
    %v393 = vld [vmem:[%s5 + $0xe8] sm:$0xff]
    %v394 = vld [vmem:[%s5 + $0xf0] sm:$0xff]
    %v395 = vld [vmem:[%s5 + $0xf8] sm:$0xff]
    %v396 = vlaneseq
    %v397 = vshrl.u32 %v396, 7
    %v398 = vsub.s32 0, %v397
    %v399 = vrot.slane %v114, %v398
    %400 = vmatprep.subr.mxu0 0.0
    %401 = vmatpush1.msra.mxu0 %v364
    %402 = vmatprep.subr.mxu0 0.0
    %403 = vmatpush1.msra.mxu0 %v365
    %404 = vmatprep.subr.mxu0 0.0
    %405 = vmatpush1.msra.mxu0 %v366
    %406 = vmatprep.subr.mxu0 0.0
    %407 = vmatpush1.msra.mxu0 %v367
    %408 = vmatprep.subr.mxu0 0.0
    %409 = vmatpush1.msra.mxu0 %v368
    %410 = vmatprep.subr.mxu0 0.0
    %411 = vmatpush1.msra.mxu0 %v369
    %412 = vmatprep.subr.mxu0 0.0
    %413 = vmatpush1.msra.mxu0 %v370
    %414 = vmatprep.subr.mxu0 0.0
    %415 = vmatpush1.msra.mxu0 %v371
    %416 = vmatprep.subr.mxu0 0.0
    %417 = vmatpush1.msra.mxu0 %v372
    %418 = vmatprep.subr.mxu0 0.0
    %419 = vmatpush1.msra.mxu0 %v373
    %420 = vmatprep.subr.mxu0 0.0
    %421 = vmatpush1.msra.mxu0 %v374
    %422 = vmatprep.subr.mxu0 0.0
    %423 = vmatpush1.msra.mxu0 %v375
    %424 = vmatprep.subr.mxu0 0.0
    %425 = vmatpush1.msra.mxu0 %v376
    %426 = vmatprep.subr.mxu0 0.0
    %427 = vmatpush1.msra.mxu0 %v377
    %428 = vmatprep.subr.mxu0 0.0
    %429 = vmatpush1.msra.mxu0 %v378
    %430 = vmatprep.subr.mxu0 0.0
    %431 = vmatpush1.msra.mxu0 %v379
    %432 = vmatprep.subr.mxu0 0.0
    %433 = vmatpush1.msra.mxu0 %v380
    %434 = vmatprep.subr.mxu0 0.0
    %435 = vmatpush1.msra.mxu0 %v381
    %436 = vmatprep.subr.mxu0 0.0
    %437 = vmatpush1.msra.mxu0 %v382
    %438 = vmatprep.subr.mxu0 0.0
    %439 = vmatpush1.msra.mxu0 %v383
    %440 = vmatprep.subr.mxu0 0.0
    %441 = vmatpush1.msra.mxu0 %v384
    %442 = vmatprep.subr.mxu0 0.0
    %443 = vmatpush1.msra.mxu0 %v385
    %444 = vmatprep.subr.mxu0 0.0
    %445 = vmatpush1.msra.mxu0 %v386
    %446 = vmatprep.subr.mxu0 0.0
    %447 = vmatpush1.msra.mxu0 %v387
    %448 = vmatprep.subr.mxu0 0.0
    %449 = vmatpush1.msra.mxu0 %v388
    %450 = vmatprep.subr.mxu0 0.0
    %451 = vmatpush1.msra.mxu0 %v389
    %452 = vmatprep.subr.mxu0 0.0
    %453 = vmatpush1.msra.mxu0 %v390
    %454 = vmatprep.subr.mxu0 0.0
    %455 = vmatpush1.msra.mxu0 %v391
    %456 = vmatprep.subr.mxu0 0.0
    %457 = vmatpush1.msra.mxu0 %v392
    %458 = vmatprep.subr.mxu0 0.0
    %459 = vmatpush1.msra.mxu0 %v393
    %460 = vmatprep.subr.mxu0 0.0
    %461 = vmatpush1.msra.mxu0 %v394
    %462 = vmatprep.subr.mxu0 0.0
    %463 = vmatpush1.msra.mxu0 %v395
    %464 = vmatprep.mubr.f32.mxu0 %v363
    %465 = vmatmul.mubr.f32.gmra.mrb[0].mxu0 %v362
    %v466 = vpop.f32.mrb[0].mxu0
    %v467 = vadd.f32 %v399, %v466
    %v468 = vpop.f32.mrb[0].mxu0
    %469 = vdwg.mxu0
    %v470 = vtanh.pop %v467
    %v471 = vmul.f32 %v470, 0.1
    %v472 = vadd.f32 %v471, %v38
    %v473 = vmax.f32 %v472, -1.0
    %v474 = vmin.f32 %v473, 1.0
    %v475 = vmul.f32 %v467, 0.5
    %v476 = vmul.f32 %v475, 1.442695
    %v477 = vpow.pop %v476
    %479 = vrot.lane.b32.xlu0 %v477, 112
    %v480 = vpop.permute.xlu0 %479
    %v482 = vmul.f32 %v40, %v480
    %v483 = vadd.f32 %v474, %v482
    %v484 = vmax.f32 %v483, -1.0
    %v485 = vmin.f32 %v484, 1.0
    %486 = vst.msk [vmem:[#allocation5] sm:$0xff] %vm190, %v474
    %vm487 = vcmask 261248
    %488 = vst.msk [vmem:[#allocation5] sm:$0xff] %vm487, %v467
    %490 = vrot.lane.b32.xlu0 %v485, 32
    %v491 = vpop.permute.xlu0 %490
    %vm493 = vcmask 392448
    %494 = vst.msk [vmem:[#allocation5] sm:$0xff] %vm493, %v491
    // Predicated region
    $region30: #{tpu_custom_call.1} parent=1 // pred_check
      _
    $region31: #{tpu_custom_call.1} parent=1 // pred_check_branch
      %496 = sbr.rel (0) target = $region33
    $region32: #{tpu_custom_call.1} parent=1 // pred_region
      %s498 = ssub.s32 128, 128
      %499 = vsyncadd [#allocation4], %s498
      %s501 = sshll.u32 [#allocation5], 4
      %s502 = int_to_ptr.vmem [resolvable:$true] %s501
      %504 = dma.vmem_to_hbm [thread:$0]  %s502, 128, %s6, [#allocation4]
    $region33: #{tpu_custom_call.1} parent=1 // pred_fallthru
      _
    // Predicated region
    $region34: #{tpu_custom_call.1} parent=1 // pred_check
      _
    $region35: #{tpu_custom_call.1} parent=1 // pred_check_branch
      %506 = sbr.rel (0) target = $region37
    $region36: #{tpu_custom_call.1} parent=1 // pred_region
      %507 = dma.done [#allocation4], 128
    $region37: #{tpu_custom_call.1} parent=1 // pred_fallthru
      _
    %508 = vsyncpa [#allocation3], 1
    %509 = vsyncpa [#allocation4], 1

</llo_original>
